<compile_context>
chip_gen: v5e
topology: v5e:2x2
jax: 0.10.0
libtpu: 0.0.40
codegen_flags: <defaults>
</compile_context>

<pallas_src>
import functools

import jax
import jax.numpy as jnp
from jax.experimental import pallas as pl
from jax.experimental.pallas import tpu as pltpu


def _basic_block_kernel(H, W, C, NB,
                        x_ref, w1_ref, b1_ref, w2_ref, b2_ref, o_ref):
    """One grid step = one batch chunk.

    x_ref : (1, NB*C, HW)  activations (also the residual)
    w*_ref: (C, 9*C)       conv weights, BN scale folded, im2col column order
    b*_ref: (C, 1)         folded BN bias
    o_ref : (1, NB*C, HW)
    """
    HW = H * W

    # ---- halo-validity masks for the 3x3 window (built once per step) ----
    pos = jax.lax.broadcasted_iota(jnp.int32, (1, HW), 1)
    if (W & (W - 1)) == 0:                  # W is a power of two -> no modulo
        col = pos & (W - 1)
    else:
        col = pos % W
    row_lo = pos >= W                       # source row y-1 exists
    row_hi = pos < (H - 1) * W              # source row y+1 exists
    col_lo = col >= 1                       # source col x-1 exists
    col_hi = col < (W - 1)                  # source col x+1 exists

    def tap_mask(ky, kx):
        conds = []
        if ky == 0:
            conds.append(row_lo)
        elif ky == 2:
            conds.append(row_hi)
        if kx == 0:
            conds.append(col_lo)
        elif kx == 2:
            conds.append(col_hi)
        if not conds:
            return None
        m = conds[0]
        for c in conds[1:]:
            m = jnp.logical_and(m, c)
        return m

    masks = [tap_mask(t // 3, t % 3) for t in range(9)]

    def conv3x3(v, wmat):
        # Build the (9*C, HW) im2col operand: tap (ky,kx) is a lane-roll of
        # the flattened image by -((ky-1)*W + (kx-1)) (XLU slot), halo-masked
        # while stacking.  One fused MXU dot replaces nine per-tap dots.
        cols = []
        for ky in range(3):
            for kx in range(3):
                t = ky * 3 + kx
                off = (ky - 1) * W + (kx - 1)
                if off == 0:
                    win = v
                else:
                    win = pltpu.roll(v, shift=(-off) % HW, axis=1)
                if masks[t] is not None:
                    win = jnp.where(masks[t], win, 0.0)
                cols.append(win)
        im2col = jnp.concatenate(cols, axis=0)            # (9*C, HW)
        return jnp.dot(wmat, im2col, preferred_element_type=jnp.float32)

    x = x_ref[0]                                          # (NB*C, HW)
    w1 = w1_ref[...]
    w2 = w2_ref[...]
    b1 = b1_ref[...]
    b2 = b2_ref[...]

    outs = []
    for n in range(NB):                                   # static, tiny
        xs = x[n * C:(n + 1) * C, :]                      # (C, HW) residual
        # conv1 (BN1 scale folded into w1) + bias + ReLU
        h1 = jnp.maximum(conv3x3(xs, w1) + b1, 0.0)
        # conv2 (BN2 scale folded into w2) + bias + residual + ReLU
        y = jnp.maximum(conv3x3(h1, w2) + b2 + xs, 0.0)
        outs.append(y)
    o_ref[0] = outs[0] if NB == 1 else jnp.concatenate(outs, axis=0)


def _default_batch_chunks(N):
    """2 'parallel' grid steps on dual-TensorCore chips (v7x), else 1."""
    try:
        kind = jax.devices()[0].device_kind.lower()
    except Exception:
        kind = ""
    if "v7" in kind and N >= 2 and N % 2 == 0:
        return 2
    return 1


def basic_block_nchw(x_nchw, w1_oihw, s1, b1, w2_oihw, s2, b2,
                     *, batch_chunks=None):
    """PyTorch-facing BasicBlock forward: NCHW in / NCHW out.

    w*_oihw: (Cout, Cin, 3, 3) conv weights (PyTorch layout, bias=False).
    s*, b*:  per-channel scale/bias of *inference-form* BatchNorm
             (s = gamma/sqrt(running_var+eps), b = beta - running_mean*s).
             Folding BN into the conv is only valid in eval() mode.
    """
    # TODO(synk): stride>1 / downsample branch not implemented (module
    # defaults are stride=1, downsample=None); reject anything else loudly.
    N, C, H, W = x_nchw.shape
    HW = H * W
    if w1_oihw.shape != (C, C, 3, 3) or w2_oihw.shape != (C, C, 3, 3):
        raise ValueError(
            "only BasicBlock with inplanes == planes, stride=1, "
            "downsample=None is implemented; got weight shapes "
            f"{w1_oihw.shape} / {w2_oihw.shape} for C={C}")
    if HW % 128 != 0:
        raise ValueError(
            f"H*W = {HW} must be a multiple of 128 for dense lane tiles")

    G = _default_batch_chunks(N) if batch_chunks is None else batch_chunks
    if G < 1 or N % G != 0:
        G = 1
    NB = N // G

    # Fold the BN scale into the conv weights (per-output-channel scale
    # commutes with the convolution) and lay them out as (Cout, 9*Cin) with
    # column order (tap = ky*3+kx, cin) matching the in-kernel im2col stack.
    w1m = jnp.transpose(w1_oihw * s1[:, None, None, None],
                        (0, 2, 3, 1)).reshape(C, 9 * C)
    w2m = jnp.transpose(w2_oihw * s2[:, None, None, None],
                        (0, 2, 3, 1)).reshape(C, 9 * C)

    # Contiguous reshape only (no transpose, no pad): each grid step sees a
    # sublane-dense (NB*C, HW) slab.
    x3d = x_nchw.reshape(G, NB * C, HW)

    kernel = functools.partial(_basic_block_kernel, H, W, C, NB)

    # TODO(synk): for real ResNet shapes (C=64..512, 56x56) single-buffer the
    # grid-invariant weights (pipeline_mode=pl.Buffered(1)), feed the MXU bf16
    # operands (f32 accumulate) and add a spatial row-tile grid axis sized
    # against per-chip VMEM (64 MiB on v7x vs 128 MiB on v5e/v6e).
    y = pl.pallas_call(
        kernel,
        out_shape=jax.ShapeDtypeStruct((G, NB * C, HW), jnp.float32),
        grid_spec=pltpu.PrefetchScalarGridSpec(
            num_scalar_prefetch=0,
            grid=(G,),
            in_specs=[
                pl.BlockSpec((1, NB * C, HW), lambda g: (g, 0, 0)),
                pl.BlockSpec((C, 9 * C), lambda g: (0, 0)),
                pl.BlockSpec((C, 1), lambda g: (0, 0)),
                pl.BlockSpec((C, 9 * C), lambda g: (0, 0)),
                pl.BlockSpec((C, 1), lambda g: (0, 0)),
            ],
            out_specs=pl.BlockSpec((1, NB * C, HW), lambda g: (g, 0, 0)),
        ),
        compiler_params=pltpu.CompilerParams(
            dimension_semantics=("parallel",)),
    )(x3d, w1m, b1.reshape(C, 1), w2m, b2.reshape(C, 1))

    return y.reshape(N, C, H, W)


def _reference_nchw(x, w1, s1, b1, w2, s2, b2):
    def conv(a, w):
        return jax.lax.conv_general_dilated(
            a, w, window_strides=(1, 1), padding=((1, 1), (1, 1)),
            dimension_numbers=('NCHW', 'OIHW', 'NCHW'))
    sh = (1, -1, 1, 1)
    h = jnp.maximum(conv(x, w1) * s1.reshape(sh) + b1.reshape(sh), 0.0)
    o = conv(h, w2) * s2.reshape(sh) + b2.reshape(sh) + x
    return jnp.maximum(o, 0.0)


if __name__ == "__main__":
    N, C, H, W = 2, 4, 16, 16   # inplanes == planes == 4, stride = 1
    eps = 1e-5

    keys = jax.random.split(jax.random.PRNGKey(0), 12)
    w1 = 0.1 * jax.random.normal(keys[0], (C, C, 3, 3), jnp.float32)
    w2 = 0.1 * jax.random.normal(keys[1], (C, C, 3, 3), jnp.float32)

    gamma1 = 1.0 + 0.1 * jax.random.normal(keys[2], (C,), jnp.float32)
    beta1 = 0.1 * jax.random.normal(keys[3], (C,), jnp.float32)
    mean1 = 0.1 * jax.random.normal(keys[4], (C,), jnp.float32)
    var1 = jnp.abs(jax.random.normal(keys[5], (C,), jnp.float32)) + 0.5

    gamma2 = 1.0 + 0.1 * jax.random.normal(keys[6], (C,), jnp.float32)
    beta2 = 0.1 * jax.random.normal(keys[7], (C,), jnp.float32)
    mean2 = 0.1 * jax.random.normal(keys[8], (C,), jnp.float32)
    var2 = jnp.abs(jax.random.normal(keys[9], (C,), jnp.float32)) + 0.5

    # Fold BN (inference form) into per-channel scale/bias.
    s1 = gamma1 / jnp.sqrt(var1 + eps)
    b1 = beta1 - mean1 * s1
    s2 = gamma2 / jnp.sqrt(var2 + eps)
    b2 = beta2 - mean2 * s2

    x_nchw = jax.random.normal(keys[10], (N, C, H, W), jnp.float32)

    out = basic_block_nchw(x_nchw, w1, s1, b1, w2, s2, b2)
    out = jax.block_until_ready(out)

    # Pure-JAX reference check (BN applied unfused; only fp-rounding differs).
    ref = _reference_nchw(x_nchw, w1, s1, b1, w2, s2, b2)
    max_err = float(jnp.max(jnp.abs(out - ref)))
    assert max_err < 1e-4, f"mismatch vs reference: {max_err}"

    print("KERNEL_OK")
</pallas_src>

<mosaic_0001>
module attributes {stable_mosaic.version = 11 : i64} {
  func.func @_basic_block_kernel(%arg0: i32, %arg1: memref<1x8x256xf32, #tpu.memory_space<vmem>>, %arg2: memref<4x36xf32, #tpu.memory_space<vmem>>, %arg3: memref<4x1xf32, #tpu.memory_space<vmem>>, %arg4: memref<4x36xf32, #tpu.memory_space<vmem>>, %arg5: memref<4x1xf32, #tpu.memory_space<vmem>>, %arg6: memref<1x8x256xf32, #tpu.memory_space<vmem>>) attributes {dimension_semantics = [#tpu.dimension_semantics<parallel>], iteration_bounds = array<i64: 1>, scalar_prefetch = 0 : i64, scratch_operands = 0 : i64, tpu.core_type = #tpu.core_type<tc>, window_params = [{transform_indices = @transform_0, window_bounds = array<i64: 1, 8, 256>}, {pipeline_mode = #tpu.pipeline_mode<synchronous>, transform_indices = @transform_1, window_bounds = array<i64: 4, 36>}, {pipeline_mode = #tpu.pipeline_mode<synchronous>, transform_indices = @transform_2, window_bounds = array<i64: 4, 1>}, {pipeline_mode = #tpu.pipeline_mode<synchronous>, transform_indices = @transform_3, window_bounds = array<i64: 4, 36>}, {pipeline_mode = #tpu.pipeline_mode<synchronous>, transform_indices = @transform_4, window_bounds = array<i64: 4, 1>}, {transform_indices = @transform_5, window_bounds = array<i64: 1, 8, 256>}]} {
    %0 = tpu.iota {dimensions = array<i32: 1>} : vector<1x256xi32>
    %c15_i32 = arith.constant 15 : i32
    %1 = vector.broadcast %c15_i32 : i32 to vector<1x256xi32>
    %2 = arith.andi %0, %1 : vector<1x256xi32>
    %c16_i32 = arith.constant 16 : i32
    %3 = vector.broadcast %c16_i32 : i32 to vector<1x256xi32>
    %4 = arith.cmpi sge, %0, %3 : vector<1x256xi32>
    %c240_i32 = arith.constant 240 : i32
    %5 = vector.broadcast %c240_i32 : i32 to vector<1x256xi32>
    %6 = arith.cmpi slt, %0, %5 : vector<1x256xi32>
    %c1_i32 = arith.constant 1 : i32
    %7 = vector.broadcast %c1_i32 : i32 to vector<1x256xi32>
    %8 = arith.cmpi sge, %2, %7 : vector<1x256xi32>
    %c15_i32_0 = arith.constant 15 : i32
    %9 = vector.broadcast %c15_i32_0 : i32 to vector<1x256xi32>
    %10 = arith.cmpi slt, %2, %9 : vector<1x256xi32>
    %11 = arith.andi %4, %8 : vector<1x256xi1>
    %12 = arith.andi %4, %10 : vector<1x256xi1>
    %13 = arith.andi %6, %8 : vector<1x256xi1>
    %14 = arith.andi %6, %10 : vector<1x256xi1>
    %c0 = arith.constant 0 : index
    %c0_1 = arith.constant 0 : index
    %c0_2 = arith.constant 0 : index
    %15 = vector.load %arg1[%c0, %c0_1, %c0_2] : memref<1x8x256xf32, #tpu.memory_space<vmem>>, vector<1x8x256xf32>
    %16 = vector.shape_cast %15 : vector<1x8x256xf32> to vector<8x256xf32>
    %c0_3 = arith.constant 0 : index
    %c0_4 = arith.constant 0 : index
    %17 = vector.load %arg2[%c0_3, %c0_4] : memref<4x36xf32, #tpu.memory_space<vmem>>, vector<4x36xf32>
    %c0_5 = arith.constant 0 : index
    %c0_6 = arith.constant 0 : index
    %18 = vector.load %arg4[%c0_5, %c0_6] : memref<4x36xf32, #tpu.memory_space<vmem>>, vector<4x36xf32>
    %c0_7 = arith.constant 0 : index
    %c0_8 = arith.constant 0 : index
    %19 = vector.load %arg3[%c0_7, %c0_8] : memref<4x1xf32, #tpu.memory_space<vmem>>, vector<4x1xf32>
    %c0_9 = arith.constant 0 : index
    %c0_10 = arith.constant 0 : index
    %20 = vector.load %arg5[%c0_9, %c0_10] : memref<4x1xf32, #tpu.memory_space<vmem>>, vector<4x1xf32>
    %21 = vector.extract_strided_slice %16 {offsets = [0, 0], sizes = [4, 256], strides = [1, 1]} : vector<8x256xf32> to vector<4x256xf32>
    %c17_i32 = arith.constant 17 : i32
    %22 = tpu.dynamic_rotate %21 by %c17_i32 dim 1 : vector<4x256xf32>, i32 -> vector<4x256xf32>
    %cst = arith.constant 0.000000e+00 : f32
    %23 = vector.shape_cast %11 : vector<1x256xi1> to vector<1x256xi1>
    %24 = vector.broadcast %23 : vector<1x256xi1> to vector<4x256xi1>
    %25 = vector.broadcast %cst : f32 to vector<4x256xf32>
    %26 = arith.select %24, %22, %25 : vector<4x256xi1>, vector<4x256xf32>
    %c16_i32_11 = arith.constant 16 : i32
    %27 = tpu.dynamic_rotate %21 by %c16_i32_11 dim 1 : vector<4x256xf32>, i32 -> vector<4x256xf32>
    %cst_12 = arith.constant 0.000000e+00 : f32
    %28 = vector.shape_cast %4 : vector<1x256xi1> to vector<1x256xi1>
    %29 = vector.broadcast %28 : vector<1x256xi1> to vector<4x256xi1>
    %30 = vector.broadcast %cst_12 : f32 to vector<4x256xf32>
    %31 = arith.select %29, %27, %30 : vector<4x256xi1>, vector<4x256xf32>
    %c15_i32_13 = arith.constant 15 : i32
    %32 = tpu.dynamic_rotate %21 by %c15_i32_13 dim 1 : vector<4x256xf32>, i32 -> vector<4x256xf32>
    %cst_14 = arith.constant 0.000000e+00 : f32
    %33 = vector.shape_cast %12 : vector<1x256xi1> to vector<1x256xi1>
    %34 = vector.broadcast %33 : vector<1x256xi1> to vector<4x256xi1>
    %35 = vector.broadcast %cst_14 : f32 to vector<4x256xf32>
    %36 = arith.select %34, %32, %35 : vector<4x256xi1>, vector<4x256xf32>
    %c1_i32_15 = arith.constant 1 : i32
    %37 = tpu.dynamic_rotate %21 by %c1_i32_15 dim 1 : vector<4x256xf32>, i32 -> vector<4x256xf32>
    %cst_16 = arith.constant 0.000000e+00 : f32
    %38 = vector.shape_cast %8 : vector<1x256xi1> to vector<1x256xi1>
    %39 = vector.broadcast %38 : vector<1x256xi1> to vector<4x256xi1>
    %40 = vector.broadcast %cst_16 : f32 to vector<4x256xf32>
    %41 = arith.select %39, %37, %40 : vector<4x256xi1>, vector<4x256xf32>
    %c255_i32 = arith.constant 255 : i32
    %42 = tpu.dynamic_rotate %21 by %c255_i32 dim 1 : vector<4x256xf32>, i32 -> vector<4x256xf32>
    %cst_17 = arith.constant 0.000000e+00 : f32
    %43 = vector.shape_cast %10 : vector<1x256xi1> to vector<1x256xi1>
    %44 = vector.broadcast %43 : vector<1x256xi1> to vector<4x256xi1>
    %45 = vector.broadcast %cst_17 : f32 to vector<4x256xf32>
    %46 = arith.select %44, %42, %45 : vector<4x256xi1>, vector<4x256xf32>
    %c241_i32 = arith.constant 241 : i32
    %47 = tpu.dynamic_rotate %21 by %c241_i32 dim 1 : vector<4x256xf32>, i32 -> vector<4x256xf32>
    %cst_18 = arith.constant 0.000000e+00 : f32
    %48 = vector.shape_cast %13 : vector<1x256xi1> to vector<1x256xi1>
    %49 = vector.broadcast %48 : vector<1x256xi1> to vector<4x256xi1>
    %50 = vector.broadcast %cst_18 : f32 to vector<4x256xf32>
    %51 = arith.select %49, %47, %50 : vector<4x256xi1>, vector<4x256xf32>
    %c240_i32_19 = arith.constant 240 : i32
    %52 = tpu.dynamic_rotate %21 by %c240_i32_19 dim 1 : vector<4x256xf32>, i32 -> vector<4x256xf32>
    %cst_20 = arith.constant 0.000000e+00 : f32
    %53 = vector.shape_cast %6 : vector<1x256xi1> to vector<1x256xi1>
    %54 = vector.broadcast %53 : vector<1x256xi1> to vector<4x256xi1>
    %55 = vector.broadcast %cst_20 : f32 to vector<4x256xf32>
    %56 = arith.select %54, %52, %55 : vector<4x256xi1>, vector<4x256xf32>
    %c239_i32 = arith.constant 239 : i32
    %57 = tpu.dynamic_rotate %21 by %c239_i32 dim 1 : vector<4x256xf32>, i32 -> vector<4x256xf32>
    %cst_21 = arith.constant 0.000000e+00 : f32
    %58 = vector.shape_cast %14 : vector<1x256xi1> to vector<1x256xi1>
    %59 = vector.broadcast %58 : vector<1x256xi1> to vector<4x256xi1>
    %60 = vector.broadcast %cst_21 : f32 to vector<4x256xf32>
    %61 = arith.select %59, %57, %60 : vector<4x256xi1>, vector<4x256xf32>
    %62 = tpu.concatenate %26, %31, %36, %41, %21, %46, %51, %56, %61 in 0 : vector<4x256xf32>, vector<4x256xf32>, vector<4x256xf32>, vector<4x256xf32>, vector<4x256xf32>, vector<4x256xf32>, vector<4x256xf32>, vector<4x256xf32>, vector<4x256xf32> -> vector<36x256xf32>
    %cst_22 = arith.constant dense<0.000000e+00> : vector<4x256xf32>
    %63 = tpu.matmul %17, %62, %cst_22 {dimension_numbers = #tpu.dot_dimension_numbers<[1], [0], [0], [1], [0, 0, 1, 1], [], []>} : vector<4x36xf32>, vector<36x256xf32>, vector<4x256xf32> -> vector<4x256xf32>
    %64 = vector.broadcast %19 : vector<4x1xf32> to vector<4x256xf32>
    %65 = arith.addf %63, %64 : vector<4x256xf32>
    %cst_23 = arith.constant 0.000000e+00 : f32
    %66 = vector.broadcast %cst_23 : f32 to vector<4x256xf32>
    %67 = arith.maximumf %65, %66 : vector<4x256xf32>
    %c17_i32_24 = arith.constant 17 : i32
    %68 = tpu.dynamic_rotate %67 by %c17_i32_24 dim 1 : vector<4x256xf32>, i32 -> vector<4x256xf32>
    %cst_25 = arith.constant 0.000000e+00 : f32
    %69 = vector.shape_cast %11 : vector<1x256xi1> to vector<1x256xi1>
    %70 = vector.broadcast %69 : vector<1x256xi1> to vector<4x256xi1>
    %71 = vector.broadcast %cst_25 : f32 to vector<4x256xf32>
    %72 = arith.select %70, %68, %71 : vector<4x256xi1>, vector<4x256xf32>
    %c16_i32_26 = arith.constant 16 : i32
    %73 = tpu.dynamic_rotate %67 by %c16_i32_26 dim 1 : vector<4x256xf32>, i32 -> vector<4x256xf32>
    %cst_27 = arith.constant 0.000000e+00 : f32
    %74 = vector.shape_cast %4 : vector<1x256xi1> to vector<1x256xi1>
    %75 = vector.broadcast %74 : vector<1x256xi1> to vector<4x256xi1>
    %76 = vector.broadcast %cst_27 : f32 to vector<4x256xf32>
    %77 = arith.select %75, %73, %76 : vector<4x256xi1>, vector<4x256xf32>
    %c15_i32_28 = arith.constant 15 : i32
    %78 = tpu.dynamic_rotate %67 by %c15_i32_28 dim 1 : vector<4x256xf32>, i32 -> vector<4x256xf32>
    %cst_29 = arith.constant 0.000000e+00 : f32
    %79 = vector.shape_cast %12 : vector<1x256xi1> to vector<1x256xi1>
    %80 = vector.broadcast %79 : vector<1x256xi1> to vector<4x256xi1>
    %81 = vector.broadcast %cst_29 : f32 to vector<4x256xf32>
    %82 = arith.select %80, %78, %81 : vector<4x256xi1>, vector<4x256xf32>
    %c1_i32_30 = arith.constant 1 : i32
    %83 = tpu.dynamic_rotate %67 by %c1_i32_30 dim 1 : vector<4x256xf32>, i32 -> vector<4x256xf32>
    %cst_31 = arith.constant 0.000000e+00 : f32
    %84 = vector.shape_cast %8 : vector<1x256xi1> to vector<1x256xi1>
    %85 = vector.broadcast %84 : vector<1x256xi1> to vector<4x256xi1>
    %86 = vector.broadcast %cst_31 : f32 to vector<4x256xf32>
    %87 = arith.select %85, %83, %86 : vector<4x256xi1>, vector<4x256xf32>
    %c255_i32_32 = arith.constant 255 : i32
    %88 = tpu.dynamic_rotate %67 by %c255_i32_32 dim 1 : vector<4x256xf32>, i32 -> vector<4x256xf32>
    %cst_33 = arith.constant 0.000000e+00 : f32
    %89 = vector.shape_cast %10 : vector<1x256xi1> to vector<1x256xi1>
    %90 = vector.broadcast %89 : vector<1x256xi1> to vector<4x256xi1>
    %91 = vector.broadcast %cst_33 : f32 to vector<4x256xf32>
    %92 = arith.select %90, %88, %91 : vector<4x256xi1>, vector<4x256xf32>
    %c241_i32_34 = arith.constant 241 : i32
    %93 = tpu.dynamic_rotate %67 by %c241_i32_34 dim 1 : vector<4x256xf32>, i32 -> vector<4x256xf32>
    %cst_35 = arith.constant 0.000000e+00 : f32
    %94 = vector.shape_cast %13 : vector<1x256xi1> to vector<1x256xi1>
    %95 = vector.broadcast %94 : vector<1x256xi1> to vector<4x256xi1>
    %96 = vector.broadcast %cst_35 : f32 to vector<4x256xf32>
    %97 = arith.select %95, %93, %96 : vector<4x256xi1>, vector<4x256xf32>
    %c240_i32_36 = arith.constant 240 : i32
    %98 = tpu.dynamic_rotate %67 by %c240_i32_36 dim 1 : vector<4x256xf32>, i32 -> vector<4x256xf32>
    %cst_37 = arith.constant 0.000000e+00 : f32
    %99 = vector.shape_cast %6 : vector<1x256xi1> to vector<1x256xi1>
    %100 = vector.broadcast %99 : vector<1x256xi1> to vector<4x256xi1>
    %101 = vector.broadcast %cst_37 : f32 to vector<4x256xf32>
    %102 = arith.select %100, %98, %101 : vector<4x256xi1>, vector<4x256xf32>
    %c239_i32_38 = arith.constant 239 : i32
    %103 = tpu.dynamic_rotate %67 by %c239_i32_38 dim 1 : vector<4x256xf32>, i32 -> vector<4x256xf32>
    %cst_39 = arith.constant 0.000000e+00 : f32
    %104 = vector.shape_cast %14 : vector<1x256xi1> to vector<1x256xi1>
    %105 = vector.broadcast %104 : vector<1x256xi1> to vector<4x256xi1>
    %106 = vector.broadcast %cst_39 : f32 to vector<4x256xf32>
    %107 = arith.select %105, %103, %106 : vector<4x256xi1>, vector<4x256xf32>
    %108 = tpu.concatenate %72, %77, %82, %87, %67, %92, %97, %102, %107 in 0 : vector<4x256xf32>, vector<4x256xf32>, vector<4x256xf32>, vector<4x256xf32>, vector<4x256xf32>, vector<4x256xf32>, vector<4x256xf32>, vector<4x256xf32>, vector<4x256xf32> -> vector<36x256xf32>
    %cst_40 = arith.constant dense<0.000000e+00> : vector<4x256xf32>
    %109 = tpu.matmul %18, %108, %cst_40 {dimension_numbers = #tpu.dot_dimension_numbers<[1], [0], [0], [1], [0, 0, 1, 1], [], []>} : vector<4x36xf32>, vector<36x256xf32>, vector<4x256xf32> -> vector<4x256xf32>
    %110 = vector.broadcast %20 : vector<4x1xf32> to vector<4x256xf32>
    %111 = arith.addf %109, %110 : vector<4x256xf32>
    %112 = arith.addf %111, %21 : vector<4x256xf32>
    %cst_41 = arith.constant 0.000000e+00 : f32
    %113 = vector.broadcast %cst_41 : f32 to vector<4x256xf32>
    %114 = arith.maximumf %112, %113 : vector<4x256xf32>
    %115 = vector.extract_strided_slice %16 {offsets = [4, 0], sizes = [4, 256], strides = [1, 1]} : vector<8x256xf32> to vector<4x256xf32>
    %c17_i32_42 = arith.constant 17 : i32
    %116 = tpu.dynamic_rotate %115 by %c17_i32_42 dim 1 : vector<4x256xf32>, i32 -> vector<4x256xf32>
    %cst_43 = arith.constant 0.000000e+00 : f32
    %117 = vector.shape_cast %11 : vector<1x256xi1> to vector<1x256xi1>
    %118 = vector.broadcast %117 : vector<1x256xi1> to vector<4x256xi1>
    %119 = vector.broadcast %cst_43 : f32 to vector<4x256xf32>
    %120 = arith.select %118, %116, %119 : vector<4x256xi1>, vector<4x256xf32>
    %c16_i32_44 = arith.constant 16 : i32
    %121 = tpu.dynamic_rotate %115 by %c16_i32_44 dim 1 : vector<4x256xf32>, i32 -> vector<4x256xf32>
    %cst_45 = arith.constant 0.000000e+00 : f32
    %122 = vector.shape_cast %4 : vector<1x256xi1> to vector<1x256xi1>
    %123 = vector.broadcast %122 : vector<1x256xi1> to vector<4x256xi1>
    %124 = vector.broadcast %cst_45 : f32 to vector<4x256xf32>
    %125 = arith.select %123, %121, %124 : vector<4x256xi1>, vector<4x256xf32>
    %c15_i32_46 = arith.constant 15 : i32
    %126 = tpu.dynamic_rotate %115 by %c15_i32_46 dim 1 : vector<4x256xf32>, i32 -> vector<4x256xf32>
    %cst_47 = arith.constant 0.000000e+00 : f32
    %127 = vector.shape_cast %12 : vector<1x256xi1> to vector<1x256xi1>
    %128 = vector.broadcast %127 : vector<1x256xi1> to vector<4x256xi1>
    %129 = vector.broadcast %cst_47 : f32 to vector<4x256xf32>
    %130 = arith.select %128, %126, %129 : vector<4x256xi1>, vector<4x256xf32>
    %c1_i32_48 = arith.constant 1 : i32
    %131 = tpu.dynamic_rotate %115 by %c1_i32_48 dim 1 : vector<4x256xf32>, i32 -> vector<4x256xf32>
    %cst_49 = arith.constant 0.000000e+00 : f32
    %132 = vector.shape_cast %8 : vector<1x256xi1> to vector<1x256xi1>
    %133 = vector.broadcast %132 : vector<1x256xi1> to vector<4x256xi1>
    %134 = vector.broadcast %cst_49 : f32 to vector<4x256xf32>
    %135 = arith.select %133, %131, %134 : vector<4x256xi1>, vector<4x256xf32>
    %c255_i32_50 = arith.constant 255 : i32
    %136 = tpu.dynamic_rotate %115 by %c255_i32_50 dim 1 : vector<4x256xf32>, i32 -> vector<4x256xf32>
    %cst_51 = arith.constant 0.000000e+00 : f32
    %137 = vector.shape_cast %10 : vector<1x256xi1> to vector<1x256xi1>
    %138 = vector.broadcast %137 : vector<1x256xi1> to vector<4x256xi1>
    %139 = vector.broadcast %cst_51 : f32 to vector<4x256xf32>
    %140 = arith.select %138, %136, %139 : vector<4x256xi1>, vector<4x256xf32>
    %c241_i32_52 = arith.constant 241 : i32
    %141 = tpu.dynamic_rotate %115 by %c241_i32_52 dim 1 : vector<4x256xf32>, i32 -> vector<4x256xf32>
    %cst_53 = arith.constant 0.000000e+00 : f32
    %142 = vector.shape_cast %13 : vector<1x256xi1> to vector<1x256xi1>
    %143 = vector.broadcast %142 : vector<1x256xi1> to vector<4x256xi1>
    %144 = vector.broadcast %cst_53 : f32 to vector<4x256xf32>
    %145 = arith.select %143, %141, %144 : vector<4x256xi1>, vector<4x256xf32>
    %c240_i32_54 = arith.constant 240 : i32
    %146 = tpu.dynamic_rotate %115 by %c240_i32_54 dim 1 : vector<4x256xf32>, i32 -> vector<4x256xf32>
    %cst_55 = arith.constant 0.000000e+00 : f32
    %147 = vector.shape_cast %6 : vector<1x256xi1> to vector<1x256xi1>
    %148 = vector.broadcast %147 : vector<1x256xi1> to vector<4x256xi1>
    %149 = vector.broadcast %cst_55 : f32 to vector<4x256xf32>
    %150 = arith.select %148, %146, %149 : vector<4x256xi1>, vector<4x256xf32>
    %c239_i32_56 = arith.constant 239 : i32
    %151 = tpu.dynamic_rotate %115 by %c239_i32_56 dim 1 : vector<4x256xf32>, i32 -> vector<4x256xf32>
    %cst_57 = arith.constant 0.000000e+00 : f32
    %152 = vector.shape_cast %14 : vector<1x256xi1> to vector<1x256xi1>
    %153 = vector.broadcast %152 : vector<1x256xi1> to vector<4x256xi1>
    %154 = vector.broadcast %cst_57 : f32 to vector<4x256xf32>
    %155 = arith.select %153, %151, %154 : vector<4x256xi1>, vector<4x256xf32>
    %156 = tpu.concatenate %120, %125, %130, %135, %115, %140, %145, %150, %155 in 0 : vector<4x256xf32>, vector<4x256xf32>, vector<4x256xf32>, vector<4x256xf32>, vector<4x256xf32>, vector<4x256xf32>, vector<4x256xf32>, vector<4x256xf32>, vector<4x256xf32> -> vector<36x256xf32>
    %cst_58 = arith.constant dense<0.000000e+00> : vector<4x256xf32>
    %157 = tpu.matmul %17, %156, %cst_58 {dimension_numbers = #tpu.dot_dimension_numbers<[1], [0], [0], [1], [0, 0, 1, 1], [], []>} : vector<4x36xf32>, vector<36x256xf32>, vector<4x256xf32> -> vector<4x256xf32>
    %158 = vector.broadcast %19 : vector<4x1xf32> to vector<4x256xf32>
    %159 = arith.addf %157, %158 : vector<4x256xf32>
    %cst_59 = arith.constant 0.000000e+00 : f32
    %160 = vector.broadcast %cst_59 : f32 to vector<4x256xf32>
    %161 = arith.maximumf %159, %160 : vector<4x256xf32>
    %c17_i32_60 = arith.constant 17 : i32
    %162 = tpu.dynamic_rotate %161 by %c17_i32_60 dim 1 : vector<4x256xf32>, i32 -> vector<4x256xf32>
    %cst_61 = arith.constant 0.000000e+00 : f32
    %163 = vector.shape_cast %11 : vector<1x256xi1> to vector<1x256xi1>
    %164 = vector.broadcast %163 : vector<1x256xi1> to vector<4x256xi1>
    %165 = vector.broadcast %cst_61 : f32 to vector<4x256xf32>
    %166 = arith.select %164, %162, %165 : vector<4x256xi1>, vector<4x256xf32>
    %c16_i32_62 = arith.constant 16 : i32
    %167 = tpu.dynamic_rotate %161 by %c16_i32_62 dim 1 : vector<4x256xf32>, i32 -> vector<4x256xf32>
    %cst_63 = arith.constant 0.000000e+00 : f32
    %168 = vector.shape_cast %4 : vector<1x256xi1> to vector<1x256xi1>
    %169 = vector.broadcast %168 : vector<1x256xi1> to vector<4x256xi1>
    %170 = vector.broadcast %cst_63 : f32 to vector<4x256xf32>
    %171 = arith.select %169, %167, %170 : vector<4x256xi1>, vector<4x256xf32>
    %c15_i32_64 = arith.constant 15 : i32
    %172 = tpu.dynamic_rotate %161 by %c15_i32_64 dim 1 : vector<4x256xf32>, i32 -> vector<4x256xf32>
    %cst_65 = arith.constant 0.000000e+00 : f32
    %173 = vector.shape_cast %12 : vector<1x256xi1> to vector<1x256xi1>
    %174 = vector.broadcast %173 : vector<1x256xi1> to vector<4x256xi1>
    %175 = vector.broadcast %cst_65 : f32 to vector<4x256xf32>
    %176 = arith.select %174, %172, %175 : vector<4x256xi1>, vector<4x256xf32>
    %c1_i32_66 = arith.constant 1 : i32
    %177 = tpu.dynamic_rotate %161 by %c1_i32_66 dim 1 : vector<4x256xf32>, i32 -> vector<4x256xf32>
    %cst_67 = arith.constant 0.000000e+00 : f32
    %178 = vector.shape_cast %8 : vector<1x256xi1> to vector<1x256xi1>
    %179 = vector.broadcast %178 : vector<1x256xi1> to vector<4x256xi1>
    %180 = vector.broadcast %cst_67 : f32 to vector<4x256xf32>
    %181 = arith.select %179, %177, %180 : vector<4x256xi1>, vector<4x256xf32>
    %c255_i32_68 = arith.constant 255 : i32
    %182 = tpu.dynamic_rotate %161 by %c255_i32_68 dim 1 : vector<4x256xf32>, i32 -> vector<4x256xf32>
    %cst_69 = arith.constant 0.000000e+00 : f32
    %183 = vector.shape_cast %10 : vector<1x256xi1> to vector<1x256xi1>
    %184 = vector.broadcast %183 : vector<1x256xi1> to vector<4x256xi1>
    %185 = vector.broadcast %cst_69 : f32 to vector<4x256xf32>
    %186 = arith.select %184, %182, %185 : vector<4x256xi1>, vector<4x256xf32>
    %c241_i32_70 = arith.constant 241 : i32
    %187 = tpu.dynamic_rotate %161 by %c241_i32_70 dim 1 : vector<4x256xf32>, i32 -> vector<4x256xf32>
    %cst_71 = arith.constant 0.000000e+00 : f32
    %188 = vector.shape_cast %13 : vector<1x256xi1> to vector<1x256xi1>
    %189 = vector.broadcast %188 : vector<1x256xi1> to vector<4x256xi1>
    %190 = vector.broadcast %cst_71 : f32 to vector<4x256xf32>
    %191 = arith.select %189, %187, %190 : vector<4x256xi1>, vector<4x256xf32>
    %c240_i32_72 = arith.constant 240 : i32
    %192 = tpu.dynamic_rotate %161 by %c240_i32_72 dim 1 : vector<4x256xf32>, i32 -> vector<4x256xf32>
    %cst_73 = arith.constant 0.000000e+00 : f32
    %193 = vector.shape_cast %6 : vector<1x256xi1> to vector<1x256xi1>
    %194 = vector.broadcast %193 : vector<1x256xi1> to vector<4x256xi1>
    %195 = vector.broadcast %cst_73 : f32 to vector<4x256xf32>
    %196 = arith.select %194, %192, %195 : vector<4x256xi1>, vector<4x256xf32>
    %c239_i32_74 = arith.constant 239 : i32
    %197 = tpu.dynamic_rotate %161 by %c239_i32_74 dim 1 : vector<4x256xf32>, i32 -> vector<4x256xf32>
    %cst_75 = arith.constant 0.000000e+00 : f32
    %198 = vector.shape_cast %14 : vector<1x256xi1> to vector<1x256xi1>
    %199 = vector.broadcast %198 : vector<1x256xi1> to vector<4x256xi1>
    %200 = vector.broadcast %cst_75 : f32 to vector<4x256xf32>
    %201 = arith.select %199, %197, %200 : vector<4x256xi1>, vector<4x256xf32>
    %202 = tpu.concatenate %166, %171, %176, %181, %161, %186, %191, %196, %201 in 0 : vector<4x256xf32>, vector<4x256xf32>, vector<4x256xf32>, vector<4x256xf32>, vector<4x256xf32>, vector<4x256xf32>, vector<4x256xf32>, vector<4x256xf32>, vector<4x256xf32> -> vector<36x256xf32>
    %cst_76 = arith.constant dense<0.000000e+00> : vector<4x256xf32>
    %203 = tpu.matmul %18, %202, %cst_76 {dimension_numbers = #tpu.dot_dimension_numbers<[1], [0], [0], [1], [0, 0, 1, 1], [], []>} : vector<4x36xf32>, vector<36x256xf32>, vector<4x256xf32> -> vector<4x256xf32>
    %204 = vector.broadcast %20 : vector<4x1xf32> to vector<4x256xf32>
    %205 = arith.addf %203, %204 : vector<4x256xf32>
    %206 = arith.addf %205, %115 : vector<4x256xf32>
    %cst_77 = arith.constant 0.000000e+00 : f32
    %207 = vector.broadcast %cst_77 : f32 to vector<4x256xf32>
    %208 = arith.maximumf %206, %207 : vector<4x256xf32>
    %209 = tpu.concatenate %114, %208 in 0 : vector<4x256xf32>, vector<4x256xf32> -> vector<8x256xf32>
    %c0_78 = arith.constant 0 : index
    %c0_79 = arith.constant 0 : index
    %c0_80 = arith.constant 0 : index
    %210 = vector.load %arg6[%c0_78, %c0_79, %c0_80] : memref<1x8x256xf32, #tpu.memory_space<vmem>>, vector<1x8x256xf32>
    %211 = vector.shape_cast %210 : vector<1x8x256xf32> to vector<8x256xf32>
    %212 = vector.shape_cast %209 : vector<8x256xf32> to vector<1x8x256xf32>
    tpu.vector_store %arg6[%c0_78, %c0_79, %c0_80], %212 {strides = array<i32>} : memref<1x8x256xf32, #tpu.memory_space<vmem>>, vector<1x8x256xf32>,
    return
  }
  func.func @transform_0(%arg0: i32) -> (i32, i32, i32) {
    %c0_i32 = arith.constant 0 : i32
    %c0_i32_0 = arith.constant 0 : i32
    %c0_i32_1 = arith.constant 0 : i32
    return %arg0, %c0_i32, %c0_i32_0 : i32, i32, i32
  }
  func.func @transform_1(%arg0: i32) -> (i32, i32) {
    %c0_i32 = arith.constant 0 : i32
    %c0_i32_0 = arith.constant 0 : i32
    %c0_i32_1 = arith.constant 0 : i32
    return %c0_i32, %c0_i32_0 : i32, i32
  }
  func.func @transform_2(%arg0: i32) -> (i32, i32) {
    %c0_i32 = arith.constant 0 : i32
    %c0_i32_0 = arith.constant 0 : i32
    %c0_i32_1 = arith.constant 0 : i32
    return %c0_i32, %c0_i32_0 : i32, i32
  }
  func.func @transform_3(%arg0: i32) -> (i32, i32) {
    %c0_i32 = arith.constant 0 : i32
    %c0_i32_0 = arith.constant 0 : i32
    %c0_i32_1 = arith.constant 0 : i32
    return %c0_i32, %c0_i32_0 : i32, i32
  }
  func.func @transform_4(%arg0: i32) -> (i32, i32) {
    %c0_i32 = arith.constant 0 : i32
    %c0_i32_0 = arith.constant 0 : i32
    %c0_i32_1 = arith.constant 0 : i32
    return %c0_i32, %c0_i32_0 : i32, i32
  }
  func.func @transform_5(%arg0: i32) -> (i32, i32, i32) {
    %c0_i32 = arith.constant 0 : i32
    %c0_i32_0 = arith.constant 0 : i32
    %c0_i32_1 = arith.constant 0 : i32
    return %arg0, %c0_i32, %c0_i32_0 : i32, i32, i32
  }
}

</mosaic_0001>

<llo_original>
// kernel: tpu_custom_call.1
$region0: #{tpu_custom_call.1}
  #allocation0 [shape = 'u32[]', space=smem, size = 0x4, offset = 0x4, fixed_abs, tag = 'smem constant byte address 0x4 - core index']
  #allocation1 [shape = 'u32[72,128]{1,0:T(1,128)}', space=vmem, size = 0x9000, scoped, tag = 'internal scratch']
  %s0 = inlined_call_operand.hbm [shape: f32[1,8,256], index: 0, kind: input, shape index: {}]
  %s1 = inlined_call_operand.vmem [shape: f32[4,36], index: 1, kind: input, shape index: {}]
  %s2 = inlined_call_operand.vmem [shape: f32[4,1], index: 2, kind: input, shape index: {}]
  %s3 = inlined_call_operand.vmem [shape: f32[4,36], index: 3, kind: input, shape index: {}]
  %s4 = inlined_call_operand.vmem [shape: f32[4,1], index: 4, kind: input, shape index: {}]
  %s5 = inlined_call_operand.hbm [shape: f32[1,8,256], index: 5, kind: output, shape index: {}]
  %s6 = sld [smem:[#allocation0]]
  $region34: #{tpu_custom_call.1} parent=0
    _
  %s8 = ssub.s32 1, %s6
  %s9 = scalar_select 0, %s8, %s6
  $region1: #{tpu_custom_call.1} parent=0
    #allocation2 [shape = 'u8[8192]{0}', space=vmem, size = 0x2000, scoped, tag = 'input window, operand 0, single buffered']
    #allocation3 [shape = 's32[1]{0}', space=sflag, size = 0x4, scoped, tag = 'scoped memory for tpu_custom_call.1']
    #allocation4 [shape = 's32[1]{0}', space=sflag, size = 0x4, scoped, tag = 'scoped memory for tpu_custom_call.1']
    #allocation5 [shape = 'u8[8192]{0}', space=vmem, size = 0x2000, scoped, tag = 'output window, operand 0, single buffered']
    %10 = vsyncpa [#allocation3], 0
    %11 = vsyncpa [#allocation4], 0
    // Predicated region
    $region2: #{tpu_custom_call.1} parent=1 // pred_check
      _
    $region3: #{tpu_custom_call.1} parent=1 // pred_check_branch
      %13 = sbr.rel (0) target = $region5
    $region4: #{tpu_custom_call.1} parent=1 // pred_region
      %15 = vsyncadd [#allocation3], 0
      %s17 = sshll.u32 %s0, 4
      %s18 = int_to_ptr.hbm [resolvable:$true] %s17
      %s19 = sshll.u32 [#allocation2], 4
      %s20 = int_to_ptr.vmem [resolvable:$true] %s19
      %22 = dma.hbm_to_vmem [thread:$0]  %s18, 256, %s20, [#allocation3]
    $region5: #{tpu_custom_call.1} parent=1 // pred_fallthru
      _
    // Predicated region
    $region6: #{tpu_custom_call.1} parent=1 // pred_check
      _
    $region7: #{tpu_custom_call.1} parent=1 // pred_check_branch
      %24 = sbr.rel (0) target = $region9
    $region8: #{tpu_custom_call.1} parent=1 // pred_region
      _
    $region9: #{tpu_custom_call.1} parent=1 // pred_fallthru
      _
    // Predicated region
    $region10: #{tpu_custom_call.1} parent=1 // pred_check
      _
    $region11: #{tpu_custom_call.1} parent=1 // pred_check_branch
      %26 = sbr.rel (0) target = $region13
    $region12: #{tpu_custom_call.1} parent=1 // pred_region
      _
    $region13: #{tpu_custom_call.1} parent=1 // pred_fallthru
      _
    // Predicated region
    $region14: #{tpu_custom_call.1} parent=1 // pred_check
      _
    $region15: #{tpu_custom_call.1} parent=1 // pred_check_branch
      %28 = sbr.rel (0) target = $region17
    $region16: #{tpu_custom_call.1} parent=1 // pred_region
      _
    $region17: #{tpu_custom_call.1} parent=1 // pred_fallthru
      _
    // Predicated region
    $region18: #{tpu_custom_call.1} parent=1 // pred_check
      _
    $region19: #{tpu_custom_call.1} parent=1 // pred_check_branch
      %30 = sbr.rel (0) target = $region21
    $region20: #{tpu_custom_call.1} parent=1 // pred_region
      _
    $region21: #{tpu_custom_call.1} parent=1 // pred_fallthru
      _
    // Predicated region
    $region22: #{tpu_custom_call.1} parent=1 // pred_check
      _
    $region23: #{tpu_custom_call.1} parent=1 // pred_check_branch
      %32 = sbr.rel (0) target = $region25
    $region24: #{tpu_custom_call.1} parent=1 // pred_region
      %34 = dma.done [#allocation3], 256
    $region25: #{tpu_custom_call.1} parent=1 // pred_fallthru
      _
    %v35 = vlaneseq
    %v36 = vand.u32 %v35, 127
    %v37 = vadd.s32 %v36, 128
    %v38 = vand.u32 %v36, 15
    %v39 = vand.u32 %v37, 15
    %vm40 = vcmp.ge.s32.totalorder %v36, 16
    %vm41 = vcmp.ge.s32.totalorder %v37, 16
    %vm42 = vcmp.lt.s32.totalorder %v36, 240
    %vm43 = vcmp.lt.s32.totalorder %v37, 240
    %vm44 = vcmp.ge.s32.totalorder %v38, 1
    %vm45 = vcmp.ge.s32.totalorder %v39, 1
    %vm46 = vcmp.lt.s32.totalorder %v38, 15
    %vm47 = vcmp.lt.s32.totalorder %v39, 15
    %vm48 = vmand %vm40, %vm44
    %vm49 = vmand %vm41, %vm45
    %vm50 = vmand %vm40, %vm46
    %vm51 = vmand %vm41, %vm47
    %vm52 = vmand %vm42, %vm44
    %vm53 = vmand %vm43, %vm45
    %vm54 = vmand %vm42, %vm46
    %vm55 = vmand %vm43, %vm47
    %v56 = vld [vmem:[#allocation2] sm:$0xff]
    %v57 = vld [vmem:[#allocation2 + $0x8] sm:$0xff]
    %v58 = vld [vmem:[%s1] sm:$0xf]
    %v59 = vld [vmem:[%s3] sm:$0xf]
    %v60 = vld [vmem:[%s2] sm:$0xf]
    %v61 = vld [vmem:[%s4] sm:$0xf]
    %62 = vrot.lane.b32.xlu0 %v56, 17
    %v63 = vpop.permute.xlu0 %62
    %64 = vrot.lane.b32.xlu0 %v57, 17
    %v65 = vpop.permute.xlu0 %64
    %vm66 = vcmp.lt.s32.totalorder %v36, 17
    %v67 = vsel %vm66, %v63, %v65
    %v68 = vsel %vm66, %v65, %v63
    %v69 = vsel %vm48, 1, 0
    %v70 = vsel %vm49, 1, 0
    %vm71 = vcmp.eq.s32.totalorder %v69, 1
    %vm72 = vcmp.eq.s32.totalorder %v70, 1
    %v73 = vsel %vm71, %v68, 0.0
    %v74 = vsel %vm72, %v67, 0.0
    %75 = vrot.lane.b32.xlu0 %v56, 16
    %v76 = vpop.permute.xlu0 %75
    %77 = vrot.lane.b32.xlu0 %v57, 16
    %v78 = vpop.permute.xlu0 %77
    %vm79 = vcmp.lt.s32.totalorder %v36, 16
    %v80 = vsel %vm79, %v76, %v78
    %v81 = vsel %vm79, %v78, %v76
    %v82 = vsel %vm40, 1, 0
    %v83 = vsel %vm41, 1, 0
    %vm84 = vcmp.eq.s32.totalorder %v82, 1
    %vm85 = vcmp.eq.s32.totalorder %v83, 1
    %v86 = vsel %vm84, %v81, 0.0
    %v87 = vsel %vm85, %v80, 0.0
    %88 = vrot.lane.b32.xlu0 %v56, 15
    %v89 = vpop.permute.xlu0 %88
    %90 = vrot.lane.b32.xlu0 %v57, 15
    %v91 = vpop.permute.xlu0 %90
    %vm92 = vcmp.lt.s32.totalorder %v36, 15
    %v93 = vsel %vm92, %v89, %v91
    %v94 = vsel %vm92, %v91, %v89
    %v95 = vsel %vm50, 1, 0
    %v96 = vsel %vm51, 1, 0
    %vm97 = vcmp.eq.s32.totalorder %v95, 1
    %vm98 = vcmp.eq.s32.totalorder %v96, 1
    %v99 = vsel %vm97, %v94, 0.0
    %v100 = vsel %vm98, %v93, 0.0
    %101 = vrot.lane.b32.xlu0 %v56, 1
    %v102 = vpop.permute.xlu0 %101
    %103 = vrot.lane.b32.xlu0 %v57, 1
    %v104 = vpop.permute.xlu0 %103
    %vm105 = vcmp.lt.s32.totalorder %v36, 1
    %v106 = vsel %vm105, %v102, %v104
    %v107 = vsel %vm105, %v104, %v102
    %v108 = vsel %vm44, 1, 0
    %v109 = vsel %vm45, 1, 0
    %vm110 = vcmp.eq.s32.totalorder %v108, 1
    %vm111 = vcmp.eq.s32.totalorder %v109, 1
    %v112 = vsel %vm110, %v107, 0.0
    %v113 = vsel %vm111, %v106, 0.0
    %114 = vrot.lane.b32.xlu0 %v56, 127
    %v115 = vpop.permute.xlu0 %114
    %116 = vrot.lane.b32.xlu0 %v57, 127
    %v117 = vpop.permute.xlu0 %116
    %vm118 = vcmp.lt.s32.totalorder %v36, 127
    %v119 = vsel %vm118, %v115, %v117
    %v120 = vsel %vm118, %v117, %v115
    %v121 = vsel %vm46, 1, 0
    %v122 = vsel %vm47, 1, 0
    %vm123 = vcmp.eq.s32.totalorder %v121, 1
    %vm124 = vcmp.eq.s32.totalorder %v122, 1
    %v125 = vsel %vm123, %v119, 0.0
    %v126 = vsel %vm124, %v120, 0.0
    %127 = vrot.lane.b32.xlu0 %v56, 113
    %v128 = vpop.permute.xlu0 %127
    %129 = vrot.lane.b32.xlu0 %v57, 113
    %v130 = vpop.permute.xlu0 %129
    %vm131 = vcmp.lt.s32.totalorder %v36, 113
    %v132 = vsel %vm131, %v128, %v130
    %v133 = vsel %vm131, %v130, %v128
    %v134 = vsel %vm52, 1, 0
    %v135 = vsel %vm53, 1, 0
    %vm136 = vcmp.eq.s32.totalorder %v134, 1
    %vm137 = vcmp.eq.s32.totalorder %v135, 1
    %v138 = vsel %vm136, %v132, 0.0
    %v139 = vsel %vm137, %v133, 0.0
    %140 = vrot.lane.b32.xlu0 %v56, 112
    %v141 = vpop.permute.xlu0 %140
    %142 = vrot.lane.b32.xlu0 %v57, 112
    %v143 = vpop.permute.xlu0 %142
    %vm144 = vcmp.lt.s32.totalorder %v36, 112
    %v145 = vsel %vm144, %v141, %v143
    %v146 = vsel %vm144, %v143, %v141
    %v147 = vsel %vm42, 1, 0
    %v148 = vsel %vm43, 1, 0
    %vm149 = vcmp.eq.s32.totalorder %v147, 1
    %vm150 = vcmp.eq.s32.totalorder %v148, 1
    %v151 = vsel %vm149, %v145, 0.0
    %v152 = vsel %vm150, %v146, 0.0
    %153 = vrot.lane.b32.xlu0 %v56, 111
    %v154 = vpop.permute.xlu0 %153
    %155 = vrot.lane.b32.xlu0 %v57, 111
    %v156 = vpop.permute.xlu0 %155
    %vm157 = vcmp.lt.s32.totalorder %v36, 111
    %v158 = vsel %vm157, %v154, %v156
    %v159 = vsel %vm157, %v156, %v154
    %v160 = vsel %vm54, 1, 0
    %v161 = vsel %vm55, 1, 0
    %vm162 = vcmp.eq.s32.totalorder %v160, 1
    %vm163 = vcmp.eq.s32.totalorder %v161, 1
    %v164 = vsel %vm162, %v158, 0.0
    %v165 = vsel %vm163, %v159, 0.0
    %v168 = vrot.slane %v86, 4
    %v169 = vrot.slane %v87, 4
    %v174 = vrot.slane %v112, 4
    %v175 = vrot.slane %v113, 4
    %v180 = vrot.slane %v125, 4
    %v181 = vrot.slane %v126, 4
    %v186 = vrot.slane %v151, 4
    %v187 = vrot.slane %v152, 4
    %vm190 = vcmask 1043456
    %v191 = vsel %vm190, %v73, %v168
    %v192 = vsel %vm190, %v74, %v169
    %v193 = vsel %vm190, %v99, %v174
    %v194 = vsel %vm190, %v100, %v175
    %v195 = vsel %vm190, %v56, %v180
    %v196 = vsel %vm190, %v57, %v181
    %v197 = vsel %vm190, %v138, %v186
    %v198 = vsel %vm190, %v139, %v187
    %200 = vset.pattern.permute.xlu0 0
    %201 = vperm.xlu0 %200, %v60
    %v202 = vpop.permute.xlu0 %201
    %vm204 = vcmask 293888
    %v206 = vsel %vm204, %v58, 0
    %v209 = vsel %vm190, %v164, 0
    %v212 = vsel %vm190, %v165, 0
    %214 = vmatpush.msra.mxu0 0.0
    %215 = vmatpush.msra.mxu0 0.0
    %216 = vmatpush.msra.mxu0 0.0
    %217 = vmatpush.msra.mxu0 0.0
    %218 = vmatpush.msra.mxu0 0.0
    %219 = vmatpush.msra.mxu0 0.0
    %220 = vmatpush.msra.mxu0 0.0
    %221 = vmatpush.msra.mxu0 0.0
    %222 = vmatpush.msra.mxu0 0.0
    %223 = vmatpush.msra.mxu0 0.0
    %224 = vmatpush.msra.mxu0 0.0
    %225 = vmatpush.msra.mxu0 %v209
    %226 = vmatpush.msra.mxu0 %v197
    %227 = vmatpush.msra.mxu0 %v195
    %228 = vmatpush.msra.mxu0 %v193
    %229 = vmatpush.msra.mxu0 %v191
    %230 = vmatmul.f32.gmra.mxu0 %v206
    %v231 = vpop.f32.mrf.mxu0
    %v232 = vadd.f32 %v202, %v231
    %233 = vdwg.mxu0
    %234 = vmatpush.msra.mxu0 0.0
    %235 = vmatpush.msra.mxu0 0.0
    %236 = vmatpush.msra.mxu0 0.0
    %237 = vmatpush.msra.mxu0 0.0
    %238 = vmatpush.msra.mxu0 0.0
    %239 = vmatpush.msra.mxu0 0.0
    %240 = vmatpush.msra.mxu0 0.0
    %241 = vmatpush.msra.mxu0 0.0
    %242 = vmatpush.msra.mxu0 0.0
    %243 = vmatpush.msra.mxu0 0.0
    %244 = vmatpush.msra.mxu0 0.0
    %245 = vmatpush.msra.mxu0 %v212
    %246 = vmatpush.msra.mxu0 %v198
    %247 = vmatpush.msra.mxu0 %v196
    %248 = vmatpush.msra.mxu0 %v194
    %249 = vmatpush.msra.mxu0 %v192
    %250 = vmatmul.f32.gmra.mxu0 %v206
    %v251 = vpop.f32.mrf.mxu0
    %v252 = vadd.f32 %v202, %v251
    %253 = vdwg.mxu0
    %v254 = vmax.f32 %v232, 0.0
    %v255 = vmax.f32 %v252, 0.0
    %256 = vrot.lane.b32.xlu0 %v254, 17
    %v257 = vpop.permute.xlu0 %256
    %258 = vrot.lane.b32.xlu0 %v255, 17
    %v259 = vpop.permute.xlu0 %258
    %v260 = vsel %vm66, %v257, %v259
    %v261 = vsel %vm66, %v259, %v257
    %v262 = vsel %vm71, %v261, 0.0
    %v263 = vsel %vm72, %v260, 0.0
    %264 = vrot.lane.b32.xlu0 %v254, 16
    %v265 = vpop.permute.xlu0 %264
    %266 = vrot.lane.b32.xlu0 %v255, 16
    %v267 = vpop.permute.xlu0 %266
    %v268 = vsel %vm79, %v265, %v267
    %v269 = vsel %vm79, %v267, %v265
    %v270 = vsel %vm84, %v269, 0.0
    %v271 = vsel %vm85, %v268, 0.0
    %272 = vrot.lane.b32.xlu0 %v254, 15
    %v273 = vpop.permute.xlu0 %272
    %274 = vrot.lane.b32.xlu0 %v255, 15
    %v275 = vpop.permute.xlu0 %274
    %v276 = vsel %vm92, %v273, %v275
    %v277 = vsel %vm92, %v275, %v273
    %v278 = vsel %vm97, %v277, 0.0
    %v279 = vsel %vm98, %v276, 0.0
    %280 = vrot.lane.b32.xlu0 %v254, 1
    %v281 = vpop.permute.xlu0 %280
    %282 = vrot.lane.b32.xlu0 %v255, 1
    %v283 = vpop.permute.xlu0 %282
    %v284 = vsel %vm105, %v281, %v283
    %v285 = vsel %vm105, %v283, %v281
    %v286 = vsel %vm110, %v285, 0.0
    %v287 = vsel %vm111, %v284, 0.0
    %288 = vrot.lane.b32.xlu0 %v254, 127
    %v289 = vpop.permute.xlu0 %288
    %290 = vrot.lane.b32.xlu0 %v255, 127
    %v291 = vpop.permute.xlu0 %290
    %v292 = vsel %vm118, %v289, %v291
    %v293 = vsel %vm118, %v291, %v289
    %v294 = vsel %vm123, %v292, 0.0
    %v295 = vsel %vm124, %v293, 0.0
    %296 = vrot.lane.b32.xlu0 %v254, 113
    %v297 = vpop.permute.xlu0 %296
    %298 = vrot.lane.b32.xlu0 %v255, 113
    %v299 = vpop.permute.xlu0 %298
    %v300 = vsel %vm131, %v297, %v299
    %v301 = vsel %vm131, %v299, %v297
    %v302 = vsel %vm136, %v300, 0.0
    %v303 = vsel %vm137, %v301, 0.0
    %304 = vrot.lane.b32.xlu0 %v254, 112
    %v305 = vpop.permute.xlu0 %304
    %306 = vrot.lane.b32.xlu0 %v255, 112
    %v307 = vpop.permute.xlu0 %306
    %v308 = vsel %vm144, %v305, %v307
    %v309 = vsel %vm144, %v307, %v305
    %v310 = vsel %vm149, %v308, 0.0
    %v311 = vsel %vm150, %v309, 0.0
    %312 = vrot.lane.b32.xlu0 %v254, 111
    %v313 = vpop.permute.xlu0 %312
    %314 = vrot.lane.b32.xlu0 %v255, 111
    %v315 = vpop.permute.xlu0 %314
    %v316 = vsel %vm157, %v313, %v315
    %v317 = vsel %vm157, %v315, %v313
    %v318 = vsel %vm162, %v316, 0.0
    %v319 = vsel %vm163, %v317, 0.0
    %v322 = vrot.slane %v270, 4
    %v323 = vrot.slane %v271, 4
    %v328 = vrot.slane %v286, 4
    %v329 = vrot.slane %v287, 4
    %v334 = vrot.slane %v294, 4
    %v335 = vrot.slane %v295, 4
    %v340 = vrot.slane %v310, 4
    %v341 = vrot.slane %v311, 4
    %v344 = vsel %vm190, %v262, %v322
    %v345 = vsel %vm190, %v263, %v323
    %v346 = vsel %vm190, %v278, %v328
    %v347 = vsel %vm190, %v279, %v329
    %v348 = vsel %vm190, %v254, %v334
    %v349 = vsel %vm190, %v255, %v335
    %v350 = vsel %vm190, %v302, %v340
    %v351 = vsel %vm190, %v303, %v341
    %353 = vset.pattern.permute.xlu0 0
    %354 = vperm.xlu0 %353, %v61
    %v355 = vpop.permute.xlu0 %354
    %v358 = vsel %vm204, %v59, 0
    %v361 = vsel %vm190, %v318, 0
    %v364 = vsel %vm190, %v319, 0
    %366 = vmatpush.msra.mxu0 0.0
    %367 = vmatpush.msra.mxu0 0.0
    %368 = vmatpush.msra.mxu0 0.0
    %369 = vmatpush.msra.mxu0 0.0
    %370 = vmatpush.msra.mxu0 0.0
    %371 = vmatpush.msra.mxu0 0.0
    %372 = vmatpush.msra.mxu0 0.0
    %373 = vmatpush.msra.mxu0 0.0
    %374 = vmatpush.msra.mxu0 0.0
    %375 = vmatpush.msra.mxu0 0.0
    %376 = vmatpush.msra.mxu0 0.0
    %377 = vmatpush.msra.mxu0 %v361
    %378 = vmatpush.msra.mxu0 %v350
    %379 = vmatpush.msra.mxu0 %v348
    %380 = vmatpush.msra.mxu0 %v346
    %381 = vmatpush.msra.mxu0 %v344
    %382 = vmatmul.f32.gmra.mxu0 %v358
    %v383 = vpop.f32.mrf.mxu0
    %v384 = vadd.f32 %v355, %v383
    %385 = vdwg.mxu0
    %386 = vmatpush.msra.mxu0 0.0
    %387 = vmatpush.msra.mxu0 0.0
    %388 = vmatpush.msra.mxu0 0.0
    %389 = vmatpush.msra.mxu0 0.0
    %390 = vmatpush.msra.mxu0 0.0
    %391 = vmatpush.msra.mxu0 0.0
    %392 = vmatpush.msra.mxu0 0.0
    %393 = vmatpush.msra.mxu0 0.0
    %394 = vmatpush.msra.mxu0 0.0
    %395 = vmatpush.msra.mxu0 0.0
    %396 = vmatpush.msra.mxu0 0.0
    %397 = vmatpush.msra.mxu0 %v364
    %398 = vmatpush.msra.mxu0 %v351
    %399 = vmatpush.msra.mxu0 %v349
    %400 = vmatpush.msra.mxu0 %v347
    %401 = vmatpush.msra.mxu0 %v345
    %402 = vmatmul.f32.gmra.mxu0 %v358
    %v403 = vpop.f32.mrf.mxu0
    %v404 = vadd.f32 %v355, %v403
    %405 = vdwg.mxu0
    %v406 = vadd.f32 %v384, %v56
    %v407 = vadd.f32 %v404, %v57
    %v408 = vmax.f32 %v406, 0.0
    %v409 = vmax.f32 %v407, 0.0
    %v412 = vrot.slane %v56, 4
    %v413 = vrot.slane %v57, 4
    %416 = vrot.lane.b32.xlu0 %v412, 17
    %v417 = vpop.permute.xlu0 %416
    %418 = vrot.lane.b32.xlu0 %v413, 17
    %v419 = vpop.permute.xlu0 %418
    %v420 = vsel %vm66, %v417, %v419
    %v421 = vsel %vm66, %v419, %v417
    %v422 = vsel %vm71, %v421, 0.0
    %v423 = vsel %vm72, %v420, 0.0
    %424 = vrot.lane.b32.xlu0 %v412, 16
    %v425 = vpop.permute.xlu0 %424
    %426 = vrot.lane.b32.xlu0 %v413, 16
    %v427 = vpop.permute.xlu0 %426
    %v428 = vsel %vm79, %v425, %v427
    %v429 = vsel %vm79, %v427, %v425
    %v430 = vsel %vm84, %v429, 0.0
    %v431 = vsel %vm85, %v428, 0.0
    %432 = vrot.lane.b32.xlu0 %v412, 15
    %v433 = vpop.permute.xlu0 %432
    %434 = vrot.lane.b32.xlu0 %v413, 15
    %v435 = vpop.permute.xlu0 %434
    %v436 = vsel %vm92, %v433, %v435
    %v437 = vsel %vm92, %v435, %v433
    %v438 = vsel %vm97, %v437, 0.0
    %v439 = vsel %vm98, %v436, 0.0
    %440 = vrot.lane.b32.xlu0 %v412, 1
    %v441 = vpop.permute.xlu0 %440
    %442 = vrot.lane.b32.xlu0 %v413, 1
    %v443 = vpop.permute.xlu0 %442
    %v444 = vsel %vm105, %v441, %v443
    %v445 = vsel %vm105, %v443, %v441
    %v446 = vsel %vm110, %v445, 0.0
    %v447 = vsel %vm111, %v444, 0.0
    %448 = vrot.lane.b32.xlu0 %v412, 127
    %v449 = vpop.permute.xlu0 %448
    %450 = vrot.lane.b32.xlu0 %v413, 127
    %v451 = vpop.permute.xlu0 %450
    %v452 = vsel %vm118, %v449, %v451
    %v453 = vsel %vm118, %v451, %v449
    %v454 = vsel %vm123, %v452, 0.0
    %v455 = vsel %vm124, %v453, 0.0
    %456 = vrot.lane.b32.xlu0 %v412, 113
    %v457 = vpop.permute.xlu0 %456
    %458 = vrot.lane.b32.xlu0 %v413, 113
    %v459 = vpop.permute.xlu0 %458
    %v460 = vsel %vm131, %v457, %v459
    %v461 = vsel %vm131, %v459, %v457
    %v462 = vsel %vm136, %v460, 0.0
    %v463 = vsel %vm137, %v461, 0.0
    %464 = vrot.lane.b32.xlu0 %v412, 112
    %v465 = vpop.permute.xlu0 %464
    %466 = vrot.lane.b32.xlu0 %v413, 112
    %v467 = vpop.permute.xlu0 %466
    %v468 = vsel %vm144, %v465, %v467
    %v469 = vsel %vm144, %v467, %v465
    %v470 = vsel %vm149, %v468, 0.0
    %v471 = vsel %vm150, %v469, 0.0
    %472 = vrot.lane.b32.xlu0 %v412, 111
    %v473 = vpop.permute.xlu0 %472
    %474 = vrot.lane.b32.xlu0 %v413, 111
    %v475 = vpop.permute.xlu0 %474
    %v476 = vsel %vm157, %v473, %v475
    %v477 = vsel %vm157, %v475, %v473
    %v478 = vsel %vm162, %v476, 0.0
    %v479 = vsel %vm163, %v477, 0.0
    %v482 = vrot.slane %v430, 4
    %v483 = vrot.slane %v431, 4
    %v488 = vrot.slane %v446, 4
    %v489 = vrot.slane %v447, 4
    %v494 = vrot.slane %v454, 4
    %v495 = vrot.slane %v455, 4
    %v500 = vrot.slane %v470, 4
    %v501 = vrot.slane %v471, 4
    %v504 = vsel %vm190, %v422, %v482
    %v505 = vsel %vm190, %v423, %v483
    %v506 = vsel %vm190, %v438, %v488
    %v507 = vsel %vm190, %v439, %v489
    %v508 = vsel %vm190, %v412, %v494
    %v509 = vsel %vm190, %v413, %v495
    %v510 = vsel %vm190, %v462, %v500
    %v511 = vsel %vm190, %v463, %v501
    %v513 = vsel %vm190, %v478, 0
    %v516 = vsel %vm190, %v479, 0
    %518 = vmatpush.msra.mxu0 0.0
    %519 = vmatpush.msra.mxu0 0.0
    %520 = vmatpush.msra.mxu0 0.0
    %521 = vmatpush.msra.mxu0 0.0
    %522 = vmatpush.msra.mxu0 0.0
    %523 = vmatpush.msra.mxu0 0.0
    %524 = vmatpush.msra.mxu0 0.0
    %525 = vmatpush.msra.mxu0 0.0
    %526 = vmatpush.msra.mxu0 0.0
    %527 = vmatpush.msra.mxu0 0.0
    %528 = vmatpush.msra.mxu0 0.0
    %529 = vmatpush.msra.mxu0 %v513
    %530 = vmatpush.msra.mxu0 %v510
    %531 = vmatpush.msra.mxu0 %v508
    %532 = vmatpush.msra.mxu0 %v506
    %533 = vmatpush.msra.mxu0 %v504
    %534 = vmatmul.f32.gmra.mxu0 %v206
    %v535 = vpop.f32.mrf.mxu0
    %v536 = vadd.f32 %v202, %v535
    %537 = vdwg.mxu0
    %538 = vmatpush.msra.mxu0 0.0
    %539 = vmatpush.msra.mxu0 0.0
    %540 = vmatpush.msra.mxu0 0.0
    %541 = vmatpush.msra.mxu0 0.0
    %542 = vmatpush.msra.mxu0 0.0
    %543 = vmatpush.msra.mxu0 0.0
    %544 = vmatpush.msra.mxu0 0.0
    %545 = vmatpush.msra.mxu0 0.0
    %546 = vmatpush.msra.mxu0 0.0
    %547 = vmatpush.msra.mxu0 0.0
    %548 = vmatpush.msra.mxu0 0.0
    %549 = vmatpush.msra.mxu0 %v516
    %550 = vmatpush.msra.mxu0 %v511
    %551 = vmatpush.msra.mxu0 %v509
    %552 = vmatpush.msra.mxu0 %v507
    %553 = vmatpush.msra.mxu0 %v505
    %554 = vmatmul.f32.gmra.mxu0 %v206
    %v555 = vpop.f32.mrf.mxu0
    %v556 = vadd.f32 %v202, %v555
    %557 = vdwg.mxu0
    %v558 = vmax.f32 %v536, 0.0
    %v559 = vmax.f32 %v556, 0.0
    %560 = vrot.lane.b32.xlu0 %v558, 17
    %v561 = vpop.permute.xlu0 %560
    %562 = vrot.lane.b32.xlu0 %v559, 17
    %v563 = vpop.permute.xlu0 %562
    %v564 = vsel %vm66, %v561, %v563
    %v565 = vsel %vm66, %v563, %v561
    %v566 = vsel %vm71, %v565, 0.0
    %v567 = vsel %vm72, %v564, 0.0
    %568 = vrot.lane.b32.xlu0 %v558, 16
    %v569 = vpop.permute.xlu0 %568
    %570 = vrot.lane.b32.xlu0 %v559, 16
    %v571 = vpop.permute.xlu0 %570
    %v572 = vsel %vm79, %v569, %v571
    %v573 = vsel %vm79, %v571, %v569
    %v574 = vsel %vm84, %v573, 0.0
    %v575 = vsel %vm85, %v572, 0.0
    %576 = vrot.lane.b32.xlu0 %v558, 15
    %v577 = vpop.permute.xlu0 %576
    %578 = vrot.lane.b32.xlu0 %v559, 15
    %v579 = vpop.permute.xlu0 %578
    %v580 = vsel %vm92, %v577, %v579
    %v581 = vsel %vm92, %v579, %v577
    %v582 = vsel %vm97, %v581, 0.0
    %v583 = vsel %vm98, %v580, 0.0
    %584 = vrot.lane.b32.xlu0 %v558, 1
    %v585 = vpop.permute.xlu0 %584
    %586 = vrot.lane.b32.xlu0 %v559, 1
    %v587 = vpop.permute.xlu0 %586
    %v588 = vsel %vm105, %v585, %v587
    %v589 = vsel %vm105, %v587, %v585
    %v590 = vsel %vm110, %v589, 0.0
    %v591 = vsel %vm111, %v588, 0.0
    %592 = vrot.lane.b32.xlu0 %v558, 127
    %v593 = vpop.permute.xlu0 %592
    %594 = vrot.lane.b32.xlu0 %v559, 127
    %v595 = vpop.permute.xlu0 %594
    %v596 = vsel %vm118, %v593, %v595
    %v597 = vsel %vm118, %v595, %v593
    %v598 = vsel %vm123, %v596, 0.0
    %v599 = vsel %vm124, %v597, 0.0
    %600 = vrot.lane.b32.xlu0 %v558, 113
    %v601 = vpop.permute.xlu0 %600
    %602 = vrot.lane.b32.xlu0 %v559, 113
    %v603 = vpop.permute.xlu0 %602
    %v604 = vsel %vm131, %v601, %v603
    %v605 = vsel %vm131, %v603, %v601
    %v606 = vsel %vm136, %v604, 0.0
    %v607 = vsel %vm137, %v605, 0.0
    %608 = vrot.lane.b32.xlu0 %v558, 112
    %v609 = vpop.permute.xlu0 %608
    %610 = vrot.lane.b32.xlu0 %v559, 112
    %v611 = vpop.permute.xlu0 %610
    %v612 = vsel %vm144, %v609, %v611
    %v613 = vsel %vm144, %v611, %v609
    %v614 = vsel %vm149, %v612, 0.0
    %v615 = vsel %vm150, %v613, 0.0
    %616 = vrot.lane.b32.xlu0 %v558, 111
    %v617 = vpop.permute.xlu0 %616
    %618 = vrot.lane.b32.xlu0 %v559, 111
    %v619 = vpop.permute.xlu0 %618
    %v620 = vsel %vm157, %v617, %v619
    %v621 = vsel %vm157, %v619, %v617
    %v622 = vsel %vm162, %v620, 0.0
    %v623 = vsel %vm163, %v621, 0.0
    %v626 = vrot.slane %v574, 4
    %v627 = vrot.slane %v575, 4
    %v632 = vrot.slane %v590, 4
    %v633 = vrot.slane %v591, 4
    %v638 = vrot.slane %v598, 4
    %v639 = vrot.slane %v599, 4
    %v644 = vrot.slane %v614, 4
    %v645 = vrot.slane %v615, 4
    %v648 = vsel %vm190, %v566, %v626
    %v649 = vsel %vm190, %v567, %v627
    %v650 = vsel %vm190, %v582, %v632
    %v651 = vsel %vm190, %v583, %v633
    %v652 = vsel %vm190, %v558, %v638
    %v653 = vsel %vm190, %v559, %v639
    %v654 = vsel %vm190, %v606, %v644
    %v655 = vsel %vm190, %v607, %v645
    %v657 = vsel %vm190, %v622, 0
    %v660 = vsel %vm190, %v623, 0
    %662 = vmatpush.msra.mxu0 0.0
    %663 = vmatpush.msra.mxu0 0.0
    %664 = vmatpush.msra.mxu0 0.0
    %665 = vmatpush.msra.mxu0 0.0
    %666 = vmatpush.msra.mxu0 0.0
    %667 = vmatpush.msra.mxu0 0.0
    %668 = vmatpush.msra.mxu0 0.0
    %669 = vmatpush.msra.mxu0 0.0
    %670 = vmatpush.msra.mxu0 0.0
    %671 = vmatpush.msra.mxu0 0.0
    %672 = vmatpush.msra.mxu0 0.0
    %673 = vmatpush.msra.mxu0 %v657
    %674 = vmatpush.msra.mxu0 %v654
    %675 = vmatpush.msra.mxu0 %v652
    %676 = vmatpush.msra.mxu0 %v650
    %677 = vmatpush.msra.mxu0 %v648
    %678 = vmatmul.f32.gmra.mxu0 %v358
    %v679 = vpop.f32.mrf.mxu0
    %v680 = vadd.f32 %v355, %v679
    %681 = vdwg.mxu0
    %682 = vmatpush.msra.mxu0 0.0
    %683 = vmatpush.msra.mxu0 0.0
    %684 = vmatpush.msra.mxu0 0.0
    %685 = vmatpush.msra.mxu0 0.0
    %686 = vmatpush.msra.mxu0 0.0
    %687 = vmatpush.msra.mxu0 0.0
    %688 = vmatpush.msra.mxu0 0.0
    %689 = vmatpush.msra.mxu0 0.0
    %690 = vmatpush.msra.mxu0 0.0
    %691 = vmatpush.msra.mxu0 0.0
    %692 = vmatpush.msra.mxu0 0.0
    %693 = vmatpush.msra.mxu0 %v660
    %694 = vmatpush.msra.mxu0 %v655
    %695 = vmatpush.msra.mxu0 %v653
    %696 = vmatpush.msra.mxu0 %v651
    %697 = vmatpush.msra.mxu0 %v649
    %698 = vmatmul.f32.gmra.mxu0 %v358
    %v699 = vpop.f32.mrf.mxu0
    %v700 = vadd.f32 %v355, %v699
    %701 = vdwg.mxu0
    %v702 = vadd.f32 %v680, %v412
    %v703 = vadd.f32 %v700, %v413
    %v704 = vmax.f32 %v702, 0.0
    %v705 = vmax.f32 %v703, 0.0
    %v708 = vrot.slane %v704, 4
    %v709 = vrot.slane %v705, 4
    %v712 = vsel %vm190, %v408, %v708
    %v713 = vsel %vm190, %v409, %v709
    %714 = vst [vmem:[#allocation5] sm:$0xff] %v712
    %715 = vst [vmem:[#allocation5 + $0x8] sm:$0xff] %v713
    // Predicated region
    $region26: #{tpu_custom_call.1} parent=1 // pred_check
      _
    $region27: #{tpu_custom_call.1} parent=1 // pred_check_branch
      %717 = sbr.rel (0) target = $region29
    $region28: #{tpu_custom_call.1} parent=1 // pred_region
      %719 = vsyncadd [#allocation4], 0
      %s721 = sshll.u32 [#allocation5], 4
      %s722 = int_to_ptr.vmem [resolvable:$true] %s721
      %s723 = sshll.u32 %s5, 4
      %s724 = int_to_ptr.hbm [resolvable:$true] %s723
      %726 = dma.vmem_to_hbm [thread:$0]  %s722, 256, %s724, [#allocation4]
    $region29: #{tpu_custom_call.1} parent=1 // pred_fallthru
      _
    // Predicated region
    $region30: #{tpu_custom_call.1} parent=1 // pred_check
      _
    $region31: #{tpu_custom_call.1} parent=1 // pred_check_branch
      %728 = sbr.rel (0) target = $region33
    $region32: #{tpu_custom_call.1} parent=1 // pred_region
      %730 = dma.done [#allocation4], 256
    $region33: #{tpu_custom_call.1} parent=1 // pred_fallthru
      _
    %731 = vsyncpa [#allocation3], 1
    %732 = vsyncpa [#allocation4], 1

</llo_original>
